<compile_context>
chip_gen: v6e
topology: v6e:2x2x1
jax: 0.10.0
libtpu: 0.0.40
codegen_flags: <defaults>
</compile_context>

<pallas_src>
import jax
import jax.numpy as jnp
from jax.experimental import pallas as pl
from jax.experimental.pallas import tpu as pltpu


# ----------------------------- fused block kernel ----------------------------

def _make_block_kernel(H, W, Cin, Cout, has_downsample, pad_lanes):
    """conv1(3x3)+bn1+relu -> conv2(3x3)+bn2 -> (+1x1 downsample) + residual."""
    HW = H * W

    def kernel(*refs):
        if has_downsample:
            (x_ref, w1_ref, b1_ref, w2_ref, b2_ref, wds_ref, bds_ref,
             out_ref, xpad_ref, hpad_ref) = refs
        else:
            (x_ref, w1_ref, b1_ref, w2_ref, b2_ref,
             out_ref, xpad_ref, hpad_ref) = refs

        x = x_ref[0]                                       # (Cin, HW) f32

        # Column-validity masks, shared by both convs.  Rows that fall outside
        # the image are covered by the zero padding in the scratch; only the
        # horizontal taps that would read across a row boundary need masking.
        col = jax.lax.broadcasted_iota(jnp.int32, (1, HW), 1) % W
        col_mask = {-1: col >= 1, 0: None, 1: col <= W - 2}

        def conv3x3(pad_ref, src, w_ref):
            # pad_ref: (C, pad + HW + pad) f32 VMEM scratch.
            # src:     (C, HW) f32 activation value.
            # w_ref:   (Cout, 9*C) bf16, BN scale folded, columns ordered
            #          (kh, kw, ci) to match the tap concatenation below.
            pad_ref[...] = jnp.zeros_like(pad_ref)         # zero halo
            pad_ref[:, pad_lanes:pad_lanes + HW] = src     # aligned interior
            taps = []
            for kh in range(3):
                for kw in range(3):
                    d = (kh - 1) * W + (kw - 1)
                    t = pad_ref[:, pad_lanes + d:pad_lanes + d + HW]
                    m = col_mask[kw - 1]
                    if m is not None:
                        t = jnp.where(m, t, 0.0)
                    taps.append(t)
            # im2col along the sublane axis (8-aligned): (9*C, HW).
            im2col = jnp.concatenate(taps, axis=0).astype(jnp.bfloat16)
            # Single MXU GEMM: (Cout, 9*C) @ (9*C, HW) -> (Cout, HW) f32.
            return jnp.dot(w_ref[...], im2col,
                           preferred_element_type=jnp.float32)

        # ---- conv1 (3x3, SAME) + folded bn1 + relu --------------------------
        h = jnp.maximum(conv3x3(xpad_ref, x, w1_ref) + b1_ref[...], 0.0)

        # ---- conv2 (3x3, SAME) + folded bn2 (stays in VMEM, fused) ----------
        y = conv3x3(hpad_ref, h, w2_ref) + b2_ref[...]

        # ---- residual --------------------------------------------------------
        if has_downsample:
            # 1x1 conv + folded BN downsample, fused into the same kernel.
            res = jnp.dot(wds_ref[...], x.astype(jnp.bfloat16),
                          preferred_element_type=jnp.float32) + bds_ref[...]
        else:
            # Identity residual at full f32 precision (Cin == Cout).
            res = x

        out_ref[0] = (y + res).astype(out_ref.dtype)       # (Cout, HW), dense

    return kernel


# ----------------------------- wrapper ---------------------------------------

def basic_block_no_relu(x, p):
    """Forward pass of BasicBlockNoRelu.  x is NCHW float32, returns NCHW."""
    N, Cin, H, W = x.shape
    Cout = p["w1"].shape[-1]
    HW = H * W
    has_ds = p.get("w_ds") is not None
    if not has_ds:
        assert Cin == Cout, (
            "identity residual requires Cin == Cout (got %d vs %d); "
            "provide a downsample" % (Cin, Cout))

    PAD = 128                       # lane padding on each side of the image
    assert W + 1 <= PAD

    def fold(w, s):
        # bn(conv(x, w)) == conv(x, w * scale) + bias   (scale per Cout)
        return w * s.reshape(1, 1, 1, -1)

    # HWIO (3,3,Ci,Co) -> (Co, 9*Ci) with columns ordered (kh, kw, ci).
    w1 = jnp.transpose(fold(p["w1"], p["s1"]), (3, 0, 1, 2)).reshape(
        Cout, 9 * Cin).astype(jnp.bfloat16)
    w2 = jnp.transpose(fold(p["w2"], p["s2"]), (3, 0, 1, 2)).reshape(
        Cout, 9 * Cout).astype(jnp.bfloat16)
    b1 = p["b1"].reshape(Cout, 1).astype(jnp.float32)
    b2 = p["b2"].reshape(Cout, 1).astype(jnp.float32)

    xf = x.reshape(N, Cin, HW)      # NCHW flatten is a free metadata reshape

    args = [xf, w1, b1, w2, b2]
    in_specs = [
        pl.BlockSpec((1, Cin, HW), lambda n: (n, 0, 0)),
        pl.BlockSpec((Cout, 9 * Cin), lambda n: (0, 0)),
        pl.BlockSpec((Cout, 1), lambda n: (0, 0)),
        pl.BlockSpec((Cout, 9 * Cout), lambda n: (0, 0)),
        pl.BlockSpec((Cout, 1), lambda n: (0, 0)),
    ]
    if has_ds:
        wds = jnp.transpose(
            p["w_ds"][0, 0] * p["s_ds"].reshape(1, -1)).astype(jnp.bfloat16)
        bds = p["b_ds"].reshape(Cout, 1).astype(jnp.float32)
        args += [wds, bds]
        in_specs += [pl.BlockSpec((Cout, Cin), lambda n: (0, 0)),
                     pl.BlockSpec((Cout, 1), lambda n: (0, 0))]

    kernel = _make_block_kernel(H, W, Cin, Cout, has_ds, PAD)

    out = pl.pallas_call(
        kernel,
        out_shape=jax.ShapeDtypeStruct((N, Cout, HW), x.dtype),
        grid_spec=pltpu.PrefetchScalarGridSpec(
            num_scalar_prefetch=0,
            grid=(N,),
            in_specs=in_specs,
            out_specs=pl.BlockSpec((1, Cout, HW), lambda n: (n, 0, 0)),
            scratch_shapes=[
                pltpu.VMEM((Cin, HW + 2 * PAD), jnp.float32),   # padded input
                pltpu.VMEM((Cout, HW + 2 * PAD), jnp.float32),  # padded hidden
            ],
        ),
        compiler_params=pltpu.CompilerParams(
            dimension_semantics=("parallel",)),
    )(*args)
    return out.reshape(N, Cout, H, W)


# ----------------------------- reference (plain JAX, f32, NCHW) --------------

def _ref_conv_bn(x, w, scale, bias, relu=False):
    y = jax.lax.conv_general_dilated(
        x, w, window_strides=(1, 1), padding="SAME",
        dimension_numbers=("NCHW", "HWIO", "NCHW"))
    y = y * scale.reshape(1, -1, 1, 1) + bias.reshape(1, -1, 1, 1)
    return jnp.maximum(y, 0.0) if relu else y


def _ref_block(x, p):
    h = _ref_conv_bn(x, p["w1"], p["s1"], p["b1"], relu=True)
    if p.get("w_ds") is not None:
        residual = _ref_conv_bn(x, p["w_ds"], p["s_ds"], p["b_ds"])
    else:
        residual = x
    return _ref_conv_bn(h, p["w2"], p["s2"], p["b2"]) + residual


# ----------------------------- parameter setup --------------------------------

def _fold_bn(gamma, beta, mean, var, eps=1e-5):
    scale = gamma / jnp.sqrt(var + eps)
    bias = beta - mean * scale
    return scale, bias


def make_params(key, cin, cout, with_downsample):
    ks = jax.random.split(key, 12)
    fan1 = 9 * cin
    fan2 = 9 * cout
    w1 = jax.random.normal(ks[0], (3, 3, cin, cout), jnp.float32) * (2.0 / fan1) ** 0.5
    w2 = jax.random.normal(ks[1], (3, 3, cout, cout), jnp.float32) * (2.0 / fan2) ** 0.5
    g1 = 0.5 + jax.random.uniform(ks[2], (cout,), jnp.float32)
    b1 = 0.1 * jax.random.normal(ks[3], (cout,), jnp.float32)
    m1 = 0.1 * jax.random.normal(ks[4], (cout,), jnp.float32)
    v1 = 0.5 + jax.random.uniform(ks[5], (cout,), jnp.float32)
    g2 = 0.5 + jax.random.uniform(ks[6], (cout,), jnp.float32)
    b2 = 0.1 * jax.random.normal(ks[7], (cout,), jnp.float32)
    m2 = 0.1 * jax.random.normal(ks[8], (cout,), jnp.float32)
    v2 = 0.5 + jax.random.uniform(ks[9], (cout,), jnp.float32)
    s1, bb1 = _fold_bn(g1, b1, m1, v1)
    s2, bb2 = _fold_bn(g2, b2, m2, v2)
    params = {"w1": w1, "s1": s1, "b1": bb1, "w2": w2, "s2": s2, "b2": bb2,
              "w_ds": None, "s_ds": None, "b_ds": None}
    if with_downsample:
        w_ds = jax.random.normal(ks[10], (1, 1, cin, cout), jnp.float32) * (2.0 / cin) ** 0.5
        g_ds = 0.5 + jax.random.uniform(ks[11], (cout,), jnp.float32)
        s_ds, b_ds = _fold_bn(g_ds, jnp.zeros((cout,), jnp.float32),
                              jnp.zeros((cout,), jnp.float32),
                              jnp.ones((cout,), jnp.float32))
        params.update({"w_ds": w_ds, "s_ds": s_ds, "b_ds": b_ds})
    return params


if __name__ == "__main__":
    key = jax.random.PRNGKey(0)
    kx, kp1, kp2 = jax.random.split(key, 3)

    # Small shapes consistent with the module: batch=2, channels=8, spatial=16.
    N, C, H, W = 2, 8, 16, 16
    x = jax.random.normal(kx, (N, C, H, W), jnp.float32)   # NCHW like PyTorch

    # The kernel feeds the MXU bf16 operands (f32 accumulation); compare
    # against the pure-f32 XLA reference with a correspondingly relaxed tol.
    tol = dict(atol=1e-1, rtol=1e-1)

    # Case 1: downsample=None (identity residual, 8 -> 8).
    p1 = make_params(kp1, C, C, with_downsample=False)
    out1 = basic_block_no_relu(x, p1)
    jax.block_until_ready(out1)
    ref1 = _ref_block(x, p1)
    assert out1.shape == ref1.shape
    assert jnp.allclose(out1, ref1, **tol), "mismatch (identity residual)"

    # Case 2: downsample = 1x1 conv + BN (channel change 8 -> 16, stride 1).
    Cout = 16
    p2 = make_params(kp2, C, Cout, with_downsample=True)
    out2 = basic_block_no_relu(x, p2)
    jax.block_until_ready(out2)
    ref2 = _ref_block(x, p2)
    assert out2.shape == ref2.shape
    assert jnp.allclose(out2, ref2, **tol), "mismatch (downsample)"

    print("KERNEL_OK")
</pallas_src>

<mosaic_0001>
module attributes {stable_mosaic.version = 11 : i64} {
  func.func @kernel(%arg0: i32, %arg1: memref<1x8x256xf32, #tpu.memory_space<vmem>>, %arg2: memref<8x72xbf16, #tpu.memory_space<vmem>>, %arg3: memref<8x1xf32, #tpu.memory_space<vmem>>, %arg4: memref<8x72xbf16, #tpu.memory_space<vmem>>, %arg5: memref<8x1xf32, #tpu.memory_space<vmem>>, %arg6: memref<1x8x256xf32, #tpu.memory_space<vmem>>, %arg7: memref<8x512xf32, #tpu.memory_space<vmem>>, %arg8: memref<8x512xf32, #tpu.memory_space<vmem>>) attributes {dimension_semantics = [#tpu.dimension_semantics<parallel>], iteration_bounds = array<i64: 2>, scalar_prefetch = 0 : i64, scratch_operands = 2 : i64, tpu.core_type = #tpu.core_type<tc>, window_params = [{transform_indices = @transform_0, window_bounds = array<i64: 1, 8, 256>}, {pipeline_mode = #tpu.pipeline_mode<synchronous>, transform_indices = @transform_1, window_bounds = array<i64: 8, 72>}, {pipeline_mode = #tpu.pipeline_mode<synchronous>, transform_indices = @transform_2, window_bounds = array<i64: 8, 1>}, {pipeline_mode = #tpu.pipeline_mode<synchronous>, transform_indices = @transform_3, window_bounds = array<i64: 8, 72>}, {pipeline_mode = #tpu.pipeline_mode<synchronous>, transform_indices = @transform_4, window_bounds = array<i64: 8, 1>}, {transform_indices = @transform_5, window_bounds = array<i64: 1, 8, 256>}]} {
    %c0 = arith.constant 0 : index
    %c0_0 = arith.constant 0 : index
    %c0_1 = arith.constant 0 : index
    %0 = vector.load %arg1[%c0, %c0_0, %c0_1] : memref<1x8x256xf32, #tpu.memory_space<vmem>>, vector<1x8x256xf32>
    %1 = vector.shape_cast %0 : vector<1x8x256xf32> to vector<8x256xf32>
    %2 = tpu.iota {dimensions = array<i32: 1>} : vector<1x256xi32>
    %c16_i32 = arith.constant 16 : i32
    %c0_i32 = arith.constant 0 : i32
    %3 = arith.cmpi eq, %c16_i32, %c0_i32 : i32
    %c1_i32 = arith.constant 1 : i32
    %4 = arith.select %3, %c1_i32, %c16_i32 : i32
    %5 = vector.broadcast %4 : i32 to vector<1x256xi32>
    %6 = arith.remsi %2, %5 : vector<1x256xi32>
    %c0_i32_2 = arith.constant 0 : i32
    %7 = vector.broadcast %c0_i32_2 : i32 to vector<1x256xi32>
    %8 = arith.cmpi ne, %6, %7 : vector<1x256xi32>
    %c0_i32_3 = arith.constant 0 : i32
    %9 = vector.broadcast %c0_i32_3 : i32 to vector<1x256xi32>
    %10 = arith.cmpi slt, %6, %9 : vector<1x256xi32>
    %c0_i32_4 = arith.constant 0 : i32
    %11 = arith.cmpi slt, %4, %c0_i32_4 : i32
    %12 = vector.broadcast %11 : i1 to vector<1x256xi1>
    %13 = vector.broadcast %12 : vector<1x256xi1> to vector<1x256xi1>
    %14 = arith.xori %10, %13 : vector<1x256xi1>
    %15 = arith.andi %14, %8 : vector<1x256xi1>
    %16 = vector.broadcast %4 : i32 to vector<1x256xi32>
    %17 = arith.addi %6, %16 : vector<1x256xi32>
    %18 = arith.select %15, %17, %6 : vector<1x256xi1>, vector<1x256xi32>
    %c1_i32_5 = arith.constant 1 : i32
    %19 = vector.broadcast %c1_i32_5 : i32 to vector<1x256xi32>
    %20 = arith.cmpi sge, %18, %19 : vector<1x256xi32>
    %c14_i32 = arith.constant 14 : i32
    %21 = vector.broadcast %c14_i32 : i32 to vector<1x256xi32>
    %22 = arith.cmpi sle, %18, %21 : vector<1x256xi32>
    %cst = arith.constant 0.000000e+00 : f32
    %23 = vector.broadcast %cst : f32 to vector<8x512xf32>
    %c0_6 = arith.constant 0 : index
    %c0_7 = arith.constant 0 : index
    %24 = vector.load %arg7[%c0_6, %c0_7] : memref<8x512xf32, #tpu.memory_space<vmem>>, vector<8x512xf32>
    tpu.vector_store %arg7[%c0_6, %c0_7], %23 {strides = array<i32>} : memref<8x512xf32, #tpu.memory_space<vmem>>, vector<8x512xf32>,
    %c0_8 = arith.constant 0 : index
    %c128 = arith.constant 128 : index
    %25 = vector.load %arg7[%c0_8, %c128] : memref<8x512xf32, #tpu.memory_space<vmem>>, vector<8x256xf32>
    tpu.vector_store %arg7[%c0_8, %c128], %1 {strides = array<i32>} : memref<8x512xf32, #tpu.memory_space<vmem>>, vector<8x256xf32>,
    %c0_9 = arith.constant 0 : index
    %c111 = arith.constant 111 : index
    %26 = vector.load %arg7[%c0_9, %c111] : memref<8x512xf32, #tpu.memory_space<vmem>>, vector<8x256xf32>
    %cst_10 = arith.constant 0.000000e+00 : f32
    %27 = vector.shape_cast %20 : vector<1x256xi1> to vector<1x256xi1>
    %28 = vector.broadcast %27 : vector<1x256xi1> to vector<8x256xi1>
    %29 = vector.broadcast %cst_10 : f32 to vector<8x256xf32>
    %30 = arith.select %28, %26, %29 : vector<8x256xi1>, vector<8x256xf32>
    %c0_11 = arith.constant 0 : index
    %c112 = arith.constant 112 : index
    %31 = vector.load %arg7[%c0_11, %c112] : memref<8x512xf32, #tpu.memory_space<vmem>>, vector<8x256xf32>
    %c0_12 = arith.constant 0 : index
    %c113 = arith.constant 113 : index
    %32 = vector.load %arg7[%c0_12, %c113] : memref<8x512xf32, #tpu.memory_space<vmem>>, vector<8x256xf32>
    %cst_13 = arith.constant 0.000000e+00 : f32
    %33 = vector.shape_cast %22 : vector<1x256xi1> to vector<1x256xi1>
    %34 = vector.broadcast %33 : vector<1x256xi1> to vector<8x256xi1>
    %35 = vector.broadcast %cst_13 : f32 to vector<8x256xf32>
    %36 = arith.select %34, %32, %35 : vector<8x256xi1>, vector<8x256xf32>
    %c0_14 = arith.constant 0 : index
    %c127 = arith.constant 127 : index
    %37 = vector.load %arg7[%c0_14, %c127] : memref<8x512xf32, #tpu.memory_space<vmem>>, vector<8x256xf32>
    %cst_15 = arith.constant 0.000000e+00 : f32
    %38 = vector.shape_cast %20 : vector<1x256xi1> to vector<1x256xi1>
    %39 = vector.broadcast %38 : vector<1x256xi1> to vector<8x256xi1>
    %40 = vector.broadcast %cst_15 : f32 to vector<8x256xf32>
    %41 = arith.select %39, %37, %40 : vector<8x256xi1>, vector<8x256xf32>
    %c0_16 = arith.constant 0 : index
    %c128_17 = arith.constant 128 : index
    %42 = vector.load %arg7[%c0_16, %c128_17] : memref<8x512xf32, #tpu.memory_space<vmem>>, vector<8x256xf32>
    %c0_18 = arith.constant 0 : index
    %c129 = arith.constant 129 : index
    %43 = vector.load %arg7[%c0_18, %c129] : memref<8x512xf32, #tpu.memory_space<vmem>>, vector<8x256xf32>
    %cst_19 = arith.constant 0.000000e+00 : f32
    %44 = vector.shape_cast %22 : vector<1x256xi1> to vector<1x256xi1>
    %45 = vector.broadcast %44 : vector<1x256xi1> to vector<8x256xi1>
    %46 = vector.broadcast %cst_19 : f32 to vector<8x256xf32>
    %47 = arith.select %45, %43, %46 : vector<8x256xi1>, vector<8x256xf32>
    %c0_20 = arith.constant 0 : index
    %c143 = arith.constant 143 : index
    %48 = vector.load %arg7[%c0_20, %c143] : memref<8x512xf32, #tpu.memory_space<vmem>>, vector<8x256xf32>
    %cst_21 = arith.constant 0.000000e+00 : f32
    %49 = vector.shape_cast %20 : vector<1x256xi1> to vector<1x256xi1>
    %50 = vector.broadcast %49 : vector<1x256xi1> to vector<8x256xi1>
    %51 = vector.broadcast %cst_21 : f32 to vector<8x256xf32>
    %52 = arith.select %50, %48, %51 : vector<8x256xi1>, vector<8x256xf32>
    %c0_22 = arith.constant 0 : index
    %c144 = arith.constant 144 : index
    %53 = vector.load %arg7[%c0_22, %c144] : memref<8x512xf32, #tpu.memory_space<vmem>>, vector<8x256xf32>
    %c0_23 = arith.constant 0 : index
    %c145 = arith.constant 145 : index
    %54 = vector.load %arg7[%c0_23, %c145] : memref<8x512xf32, #tpu.memory_space<vmem>>, vector<8x256xf32>
    %cst_24 = arith.constant 0.000000e+00 : f32
    %55 = vector.shape_cast %22 : vector<1x256xi1> to vector<1x256xi1>
    %56 = vector.broadcast %55 : vector<1x256xi1> to vector<8x256xi1>
    %57 = vector.broadcast %cst_24 : f32 to vector<8x256xf32>
    %58 = arith.select %56, %54, %57 : vector<8x256xi1>, vector<8x256xf32>
    %59 = tpu.concatenate %30, %31, %36, %41, %42, %47, %52, %53, %58 in 0 : vector<8x256xf32>, vector<8x256xf32>, vector<8x256xf32>, vector<8x256xf32>, vector<8x256xf32>, vector<8x256xf32>, vector<8x256xf32>, vector<8x256xf32>, vector<8x256xf32> -> vector<72x256xf32>
    %60 = arith.truncf %59 : vector<72x256xf32> to vector<72x256xbf16>
    %c0_25 = arith.constant 0 : index
    %c0_26 = arith.constant 0 : index
    %61 = vector.load %arg2[%c0_25, %c0_26] : memref<8x72xbf16, #tpu.memory_space<vmem>>, vector<8x72xbf16>
    %cst_27 = arith.constant dense<0.000000e+00> : vector<8x256xf32>
    %62 = tpu.matmul %61, %60, %cst_27 {dimension_numbers = #tpu.dot_dimension_numbers<[1], [0], [0], [1], [0, 0, 1, 1], [], []>} : vector<8x72xbf16>, vector<72x256xbf16>, vector<8x256xf32> -> vector<8x256xf32>
    %c0_28 = arith.constant 0 : index
    %c0_29 = arith.constant 0 : index
    %63 = vector.load %arg3[%c0_28, %c0_29] : memref<8x1xf32, #tpu.memory_space<vmem>>, vector<8x1xf32>
    %64 = vector.broadcast %63 : vector<8x1xf32> to vector<8x256xf32>
    %65 = arith.addf %62, %64 : vector<8x256xf32>
    %cst_30 = arith.constant 0.000000e+00 : f32
    %66 = vector.broadcast %cst_30 : f32 to vector<8x256xf32>
    %67 = arith.maximumf %65, %66 : vector<8x256xf32>
    %cst_31 = arith.constant 0.000000e+00 : f32
    %68 = vector.broadcast %cst_31 : f32 to vector<8x512xf32>
    %c0_32 = arith.constant 0 : index
    %c0_33 = arith.constant 0 : index
    %69 = vector.load %arg8[%c0_32, %c0_33] : memref<8x512xf32, #tpu.memory_space<vmem>>, vector<8x512xf32>
    tpu.vector_store %arg8[%c0_32, %c0_33], %68 {strides = array<i32>} : memref<8x512xf32, #tpu.memory_space<vmem>>, vector<8x512xf32>,
    %c0_34 = arith.constant 0 : index
    %c128_35 = arith.constant 128 : index
    %70 = vector.load %arg8[%c0_34, %c128_35] : memref<8x512xf32, #tpu.memory_space<vmem>>, vector<8x256xf32>
    tpu.vector_store %arg8[%c0_34, %c128_35], %67 {strides = array<i32>} : memref<8x512xf32, #tpu.memory_space<vmem>>, vector<8x256xf32>,
    %c0_36 = arith.constant 0 : index
    %c111_37 = arith.constant 111 : index
    %71 = vector.load %arg8[%c0_36, %c111_37] : memref<8x512xf32, #tpu.memory_space<vmem>>, vector<8x256xf32>
    %cst_38 = arith.constant 0.000000e+00 : f32
    %72 = vector.shape_cast %20 : vector<1x256xi1> to vector<1x256xi1>
    %73 = vector.broadcast %72 : vector<1x256xi1> to vector<8x256xi1>
    %74 = vector.broadcast %cst_38 : f32 to vector<8x256xf32>
    %75 = arith.select %73, %71, %74 : vector<8x256xi1>, vector<8x256xf32>
    %c0_39 = arith.constant 0 : index
    %c112_40 = arith.constant 112 : index
    %76 = vector.load %arg8[%c0_39, %c112_40] : memref<8x512xf32, #tpu.memory_space<vmem>>, vector<8x256xf32>
    %c0_41 = arith.constant 0 : index
    %c113_42 = arith.constant 113 : index
    %77 = vector.load %arg8[%c0_41, %c113_42] : memref<8x512xf32, #tpu.memory_space<vmem>>, vector<8x256xf32>
    %cst_43 = arith.constant 0.000000e+00 : f32
    %78 = vector.shape_cast %22 : vector<1x256xi1> to vector<1x256xi1>
    %79 = vector.broadcast %78 : vector<1x256xi1> to vector<8x256xi1>
    %80 = vector.broadcast %cst_43 : f32 to vector<8x256xf32>
    %81 = arith.select %79, %77, %80 : vector<8x256xi1>, vector<8x256xf32>
    %c0_44 = arith.constant 0 : index
    %c127_45 = arith.constant 127 : index
    %82 = vector.load %arg8[%c0_44, %c127_45] : memref<8x512xf32, #tpu.memory_space<vmem>>, vector<8x256xf32>
    %cst_46 = arith.constant 0.000000e+00 : f32
    %83 = vector.shape_cast %20 : vector<1x256xi1> to vector<1x256xi1>
    %84 = vector.broadcast %83 : vector<1x256xi1> to vector<8x256xi1>
    %85 = vector.broadcast %cst_46 : f32 to vector<8x256xf32>
    %86 = arith.select %84, %82, %85 : vector<8x256xi1>, vector<8x256xf32>
    %c0_47 = arith.constant 0 : index
    %c128_48 = arith.constant 128 : index
    %87 = vector.load %arg8[%c0_47, %c128_48] : memref<8x512xf32, #tpu.memory_space<vmem>>, vector<8x256xf32>
    %c0_49 = arith.constant 0 : index
    %c129_50 = arith.constant 129 : index
    %88 = vector.load %arg8[%c0_49, %c129_50] : memref<8x512xf32, #tpu.memory_space<vmem>>, vector<8x256xf32>
    %cst_51 = arith.constant 0.000000e+00 : f32
    %89 = vector.shape_cast %22 : vector<1x256xi1> to vector<1x256xi1>
    %90 = vector.broadcast %89 : vector<1x256xi1> to vector<8x256xi1>
    %91 = vector.broadcast %cst_51 : f32 to vector<8x256xf32>
    %92 = arith.select %90, %88, %91 : vector<8x256xi1>, vector<8x256xf32>
    %c0_52 = arith.constant 0 : index
    %c143_53 = arith.constant 143 : index
    %93 = vector.load %arg8[%c0_52, %c143_53] : memref<8x512xf32, #tpu.memory_space<vmem>>, vector<8x256xf32>
    %cst_54 = arith.constant 0.000000e+00 : f32
    %94 = vector.shape_cast %20 : vector<1x256xi1> to vector<1x256xi1>
    %95 = vector.broadcast %94 : vector<1x256xi1> to vector<8x256xi1>
    %96 = vector.broadcast %cst_54 : f32 to vector<8x256xf32>
    %97 = arith.select %95, %93, %96 : vector<8x256xi1>, vector<8x256xf32>
    %c0_55 = arith.constant 0 : index
    %c144_56 = arith.constant 144 : index
    %98 = vector.load %arg8[%c0_55, %c144_56] : memref<8x512xf32, #tpu.memory_space<vmem>>, vector<8x256xf32>
    %c0_57 = arith.constant 0 : index
    %c145_58 = arith.constant 145 : index
    %99 = vector.load %arg8[%c0_57, %c145_58] : memref<8x512xf32, #tpu.memory_space<vmem>>, vector<8x256xf32>
    %cst_59 = arith.constant 0.000000e+00 : f32
    %100 = vector.shape_cast %22 : vector<1x256xi1> to vector<1x256xi1>
    %101 = vector.broadcast %100 : vector<1x256xi1> to vector<8x256xi1>
    %102 = vector.broadcast %cst_59 : f32 to vector<8x256xf32>
    %103 = arith.select %101, %99, %102 : vector<8x256xi1>, vector<8x256xf32>
    %104 = tpu.concatenate %75, %76, %81, %86, %87, %92, %97, %98, %103 in 0 : vector<8x256xf32>, vector<8x256xf32>, vector<8x256xf32>, vector<8x256xf32>, vector<8x256xf32>, vector<8x256xf32>, vector<8x256xf32>, vector<8x256xf32>, vector<8x256xf32> -> vector<72x256xf32>
    %105 = arith.truncf %104 : vector<72x256xf32> to vector<72x256xbf16>
    %c0_60 = arith.constant 0 : index
    %c0_61 = arith.constant 0 : index
    %106 = vector.load %arg4[%c0_60, %c0_61] : memref<8x72xbf16, #tpu.memory_space<vmem>>, vector<8x72xbf16>
    %cst_62 = arith.constant dense<0.000000e+00> : vector<8x256xf32>
    %107 = tpu.matmul %106, %105, %cst_62 {dimension_numbers = #tpu.dot_dimension_numbers<[1], [0], [0], [1], [0, 0, 1, 1], [], []>} : vector<8x72xbf16>, vector<72x256xbf16>, vector<8x256xf32> -> vector<8x256xf32>
    %c0_63 = arith.constant 0 : index
    %c0_64 = arith.constant 0 : index
    %108 = vector.load %arg5[%c0_63, %c0_64] : memref<8x1xf32, #tpu.memory_space<vmem>>, vector<8x1xf32>
    %109 = vector.broadcast %108 : vector<8x1xf32> to vector<8x256xf32>
    %110 = arith.addf %107, %109 : vector<8x256xf32>
    %111 = arith.addf %110, %1 : vector<8x256xf32>
    %c0_65 = arith.constant 0 : index
    %c0_66 = arith.constant 0 : index
    %c0_67 = arith.constant 0 : index
    %112 = vector.load %arg6[%c0_65, %c0_66, %c0_67] : memref<1x8x256xf32, #tpu.memory_space<vmem>>, vector<1x8x256xf32>
    %113 = vector.shape_cast %112 : vector<1x8x256xf32> to vector<8x256xf32>
    %114 = vector.shape_cast %111 : vector<8x256xf32> to vector<1x8x256xf32>
    tpu.vector_store %arg6[%c0_65, %c0_66, %c0_67], %114 {strides = array<i32>} : memref<1x8x256xf32, #tpu.memory_space<vmem>>, vector<1x8x256xf32>,
    return
  }
  func.func @transform_0(%arg0: i32) -> (i32, i32, i32) {
    %c0_i32 = arith.constant 0 : i32
    %c0_i32_0 = arith.constant 0 : i32
    %c0_i32_1 = arith.constant 0 : i32
    return %arg0, %c0_i32, %c0_i32_0 : i32, i32, i32
  }
  func.func @transform_1(%arg0: i32) -> (i32, i32) {
    %c0_i32 = arith.constant 0 : i32
    %c0_i32_0 = arith.constant 0 : i32
    %c0_i32_1 = arith.constant 0 : i32
    return %c0_i32, %c0_i32_0 : i32, i32
  }
  func.func @transform_2(%arg0: i32) -> (i32, i32) {
    %c0_i32 = arith.constant 0 : i32
    %c0_i32_0 = arith.constant 0 : i32
    %c0_i32_1 = arith.constant 0 : i32
    return %c0_i32, %c0_i32_0 : i32, i32
  }
  func.func @transform_3(%arg0: i32) -> (i32, i32) {
    %c0_i32 = arith.constant 0 : i32
    %c0_i32_0 = arith.constant 0 : i32
    %c0_i32_1 = arith.constant 0 : i32
    return %c0_i32, %c0_i32_0 : i32, i32
  }
  func.func @transform_4(%arg0: i32) -> (i32, i32) {
    %c0_i32 = arith.constant 0 : i32
    %c0_i32_0 = arith.constant 0 : i32
    %c0_i32_1 = arith.constant 0 : i32
    return %c0_i32, %c0_i32_0 : i32, i32
  }
  func.func @transform_5(%arg0: i32) -> (i32, i32, i32) {
    %c0_i32 = arith.constant 0 : i32
    %c0_i32_0 = arith.constant 0 : i32
    %c0_i32_1 = arith.constant 0 : i32
    return %arg0, %c0_i32, %c0_i32_0 : i32, i32, i32
  }
}

</mosaic_0001>

<llo_original>
// kernel: tpu_custom_call.1
$region0: #{tpu_custom_call.1}
  #allocation0 [shape = 'u32[]', space=smem, size = 0x4, offset = 0x4, fixed_abs, tag = 'smem constant byte address 0x4 - core index']
  #allocation1 [shape = 'u32[144,128]{1,0:T(1,128)}', space=vmem, size = 0x12000, scoped, tag = 'internal scratch']
  #allocation2 [shape = 'f32[8,512]{1,0:T(8,128)}', space=vmem, size = 0x4000, scoped, tag = 'scratch operand']
  #allocation3 [shape = 'f32[8,512]{1,0:T(8,128)}', space=vmem, size = 0x4000, scoped, tag = 'scratch operand']
  %s0 = inlined_call_operand.hbm [shape: f32[2,8,256], index: 0, kind: input, shape index: {}]
  %s1 = inlined_call_operand.vmem [shape: bf16[8,72], index: 1, kind: input, shape index: {}]
  %s2 = inlined_call_operand.vmem [shape: f32[8,1], index: 2, kind: input, shape index: {}]
  %s3 = inlined_call_operand.vmem [shape: bf16[8,72], index: 3, kind: input, shape index: {}]
  %s4 = inlined_call_operand.vmem [shape: f32[8,1], index: 4, kind: input, shape index: {}]
  %s5 = inlined_call_operand.hbm [shape: f32[2,8,256], index: 5, kind: output, shape index: {}]
  %s6 = sld [smem:[#allocation0]]
  $region57: #{tpu_custom_call.1} parent=0
    _
  %s8 = ssub.s32 1, %s6
  %s9 = scalar_select 0, %s8, %s6
  $region1: #{tpu_custom_call.1} parent=0
    #allocation4 [shape = 'u8[16384]{0}', space=vmem, size = 0x4000, scoped, tag = 'input window, operand 0']
    #allocation5 [shape = 's32[2]{0}', space=sflag, size = 0x8, scoped, tag = 'scoped memory for tpu_custom_call.1']
    #allocation6 [shape = 's32[2]{0}', space=sflag, size = 0x8, scoped, tag = 'scoped memory for tpu_custom_call.1']
    #allocation7 [shape = 'u8[16384]{0}', space=vmem, size = 0x4000, scoped, tag = 'output window, operand 0']
    %10 = vsyncpa [#allocation5], 0
    %s11 = scalar_lea.sflag [#allocation5], 1
    %12 = vsyncpa %s11, 0
    %13 = vsyncpa [#allocation6], 0
    %s14 = scalar_lea.sflag [#allocation6], 1
    %15 = vsyncpa %s14, 0
    loop: start=0, step=1, limit=4
    $region2: #{tpu_custom_call.1} parent=1 // loop_pre_header
      _
    $region3: #{tpu_custom_call.1} parent=1 // loop_header
      %s17 = sphi 0, %s21
      %p18 = scmp.ge.s32.totalorder %s17, 4
      %s27 = sphi 0, %s29
      %s30 = sphi 0, %s27
      %s31 = sphi 0, %s30
      %s47 = sphi 0, %s31
      %s51 = sphi 0, %s51
      %s53 = sphi 0, %s51
      %s54 = sphi 0, %s53
      %s68 = sphi 0, %s54
      %s72 = sphi 0, %s72
      %s74 = sphi 0, %s72
      %s75 = sphi 0, %s74
      %s89 = sphi 0, %s75
      %s93 = sphi 0, %s93
      %s95 = sphi 0, %s93
      %s96 = sphi 0, %s95
      %s110 = sphi 0, %s96
      %s114 = sphi 0, %s114
      %s116 = sphi 0, %s114
      %s117 = sphi 0, %s116
      %s131 = sphi 0, %s117
      %s137 = sphi 0, %s139
      %s140 = sphi 0, %s137
      %s141 = sphi 0, %s140
      %s157 = sphi 0, %s141
    $region4: #{tpu_custom_call.1} parent=1 // loop_header_branch
      %20 = sbr.rel (%p18) target = $region8
    $region5: #{tpu_custom_call.1} parent=1 // loop_body
      %s22 = ssub.s32 %s17, 1
      %s23 = ssub.s32 %s17, 2
      %s24 = sadd.s32 %s17, 1
      %s25 = ssub.s32 %s17, %s24
      %p26 = scmp.eq.s32.totalorder %s25, 0
      %s28 = sadd.s32 %s27, 1
      %s29 = scalar_select %p26, %s27, %s28
      %p32 = pneg %p26
      %p33 = scmp.eq.s32.totalorder %s17, 1
      %p34 = por %p32, %p33
      %p35 = scmp.ne.s32.totalorder %s27, %s30
      %p36 = scmp.eq.s32.totalorder %s17, 0
      %p37 = por %p35, %p36
      %p38 = scmp.ne.s32.totalorder %s27, %s30
      %p39 = scmp.eq.s32.totalorder %s22, 1
      %p40 = por %p38, %p39
      %p41 = scmp.ne.s32.totalorder %s30, %s31
      %p42 = scmp.eq.s32.totalorder %s22, 0
      %p43 = por %p41, %p42
      %p44 = scmp.ne.s32.totalorder %s30, %s31
      %p45 = scmp.eq.s32.totalorder %s23, 1
      %p46 = por %p44, %p45
      %p48 = scmp.ne.s32.totalorder %s31, %s47
      %p49 = scmp.eq.s32.totalorder %s23, 0
      %p50 = por %p48, %p49
      %s52 = sadd.s32 %s51, 1
      %p55 = scmp.eq.s32.totalorder %s17, 1
      %p56 = scmp.ne.s32.totalorder %s51, %s53
      %p57 = scmp.eq.s32.totalorder %s17, 0
      %p58 = por %p56, %p57
      %p59 = scmp.ne.s32.totalorder %s51, %s53
      %p60 = scmp.eq.s32.totalorder %s22, 1
      %p61 = por %p59, %p60
      %p62 = scmp.ne.s32.totalorder %s53, %s54
      %p63 = scmp.eq.s32.totalorder %s22, 0
      %p64 = por %p62, %p63
      %p65 = scmp.ne.s32.totalorder %s53, %s54
      %p66 = scmp.eq.s32.totalorder %s23, 1
      %p67 = por %p65, %p66
      %p69 = scmp.ne.s32.totalorder %s54, %s68
      %p70 = scmp.eq.s32.totalorder %s23, 0
      %p71 = por %p69, %p70
      %s73 = sadd.s32 %s72, 1
      %p76 = scmp.eq.s32.totalorder %s17, 1
      %p77 = scmp.ne.s32.totalorder %s72, %s74
      %p78 = scmp.eq.s32.totalorder %s17, 0
      %p79 = por %p77, %p78
      %p80 = scmp.ne.s32.totalorder %s72, %s74
      %p81 = scmp.eq.s32.totalorder %s22, 1
      %p82 = por %p80, %p81
      %p83 = scmp.ne.s32.totalorder %s74, %s75
      %p84 = scmp.eq.s32.totalorder %s22, 0
      %p85 = por %p83, %p84
      %p86 = scmp.ne.s32.totalorder %s74, %s75
      %p87 = scmp.eq.s32.totalorder %s23, 1
      %p88 = por %p86, %p87
      %p90 = scmp.ne.s32.totalorder %s75, %s89
      %p91 = scmp.eq.s32.totalorder %s23, 0
      %p92 = por %p90, %p91
      %s94 = sadd.s32 %s93, 1
      %p97 = scmp.eq.s32.totalorder %s17, 1
      %p98 = scmp.ne.s32.totalorder %s93, %s95
      %p99 = scmp.eq.s32.totalorder %s17, 0
      %p100 = por %p98, %p99
      %p101 = scmp.ne.s32.totalorder %s93, %s95
      %p102 = scmp.eq.s32.totalorder %s22, 1
      %p103 = por %p101, %p102
      %p104 = scmp.ne.s32.totalorder %s95, %s96
      %p105 = scmp.eq.s32.totalorder %s22, 0
      %p106 = por %p104, %p105
      %p107 = scmp.ne.s32.totalorder %s95, %s96
      %p108 = scmp.eq.s32.totalorder %s23, 1
      %p109 = por %p107, %p108
      %p111 = scmp.ne.s32.totalorder %s96, %s110
      %p112 = scmp.eq.s32.totalorder %s23, 0
      %p113 = por %p111, %p112
      %s115 = sadd.s32 %s114, 1
      %p118 = scmp.eq.s32.totalorder %s17, 1
      %p119 = scmp.ne.s32.totalorder %s114, %s116
      %p120 = scmp.eq.s32.totalorder %s17, 0
      %p121 = por %p119, %p120
      %p122 = scmp.ne.s32.totalorder %s114, %s116
      %p123 = scmp.eq.s32.totalorder %s22, 1
      %p124 = por %p122, %p123
      %p125 = scmp.ne.s32.totalorder %s116, %s117
      %p126 = scmp.eq.s32.totalorder %s22, 0
      %p127 = por %p125, %p126
      %p128 = scmp.ne.s32.totalorder %s116, %s117
      %p129 = scmp.eq.s32.totalorder %s23, 1
      %p130 = por %p128, %p129
      %p132 = scmp.ne.s32.totalorder %s117, %s131
      %p133 = scmp.eq.s32.totalorder %s23, 0
      %p134 = por %p132, %p133
      %s135 = ssub.s32 %s17, %s24
      %p136 = scmp.eq.s32.totalorder %s135, 0
      %s138 = sadd.s32 %s137, 1
      %s139 = scalar_select %p136, %s137, %s138
      %p142 = pneg %p136
      %p143 = scmp.eq.s32.totalorder %s17, 1
      %p144 = por %p142, %p143
      %p145 = scmp.ne.s32.totalorder %s137, %s140
      %p146 = scmp.eq.s32.totalorder %s17, 0
      %p147 = por %p145, %p146
      %p148 = scmp.ne.s32.totalorder %s137, %s140
      %p149 = scmp.eq.s32.totalorder %s22, 1
      %p150 = por %p148, %p149
      %p151 = scmp.ne.s32.totalorder %s140, %s141
      %p152 = scmp.eq.s32.totalorder %s22, 0
      %p153 = por %p151, %p152
      %p154 = scmp.ne.s32.totalorder %s140, %s141
      %p155 = scmp.eq.s32.totalorder %s23, 1
      %p156 = por %p154, %p155
      %p158 = scmp.ne.s32.totalorder %s141, %s157
      %p159 = scmp.eq.s32.totalorder %s23, 0
      %p160 = por %p158, %p159
      %p161 = scmp.le.s32.totalorder 1, %s17
      %p162 = scmp.lt.s32.totalorder %s17, 3
      %p163 = pnand %p161, %p162
      %p164 = pneg %p163
      // Predicated region
      $region9: #{tpu_custom_call.1} parent=5 // pred_check
        _
      $region10: #{tpu_custom_call.1} parent=5 // pred_check_branch
        %166 = sbr.rel (%p163) target = $region12
      $region11: #{tpu_custom_call.1} parent=5 // pred_region
        %s167 = ssub.s32 %s17, 1
        // Predicated region
        $region13: #{tpu_custom_call.1} parent=11 // pred_check
          %p168 = pneg %p64
        $region14: #{tpu_custom_call.1} parent=11 // pred_check_branch
          %170 = sbr.rel (%p168) target = $region16
        $region15: #{tpu_custom_call.1} parent=11 // pred_region
          _
        $region16: #{tpu_custom_call.1} parent=11 // pred_fallthru
          _
        // Predicated region
        $region17: #{tpu_custom_call.1} parent=11 // pred_check
          %p171 = pneg %p85
        $region18: #{tpu_custom_call.1} parent=11 // pred_check_branch
          %173 = sbr.rel (%p171) target = $region20
        $region19: #{tpu_custom_call.1} parent=11 // pred_region
          _
        $region20: #{tpu_custom_call.1} parent=11 // pred_fallthru
          _
        // Predicated region
        $region21: #{tpu_custom_call.1} parent=11 // pred_check
          %p174 = pneg %p106
        $region22: #{tpu_custom_call.1} parent=11 // pred_check_branch
          %176 = sbr.rel (%p174) target = $region24
        $region23: #{tpu_custom_call.1} parent=11 // pred_region
          _
        $region24: #{tpu_custom_call.1} parent=11 // pred_fallthru
          _
        // Predicated region
        $region25: #{tpu_custom_call.1} parent=11 // pred_check
          %p177 = pneg %p127
        $region26: #{tpu_custom_call.1} parent=11 // pred_check_branch
          %179 = sbr.rel (%p177) target = $region28
        $region27: #{tpu_custom_call.1} parent=11 // pred_region
          _
        $region28: #{tpu_custom_call.1} parent=11 // pred_fallthru
          _
      $region12: #{tpu_custom_call.1} parent=5 // pred_fallthru
        _
      %p180 = scmp.lt.s32.totalorder %s17, 2
      // Predicated region
      $region29: #{tpu_custom_call.1} parent=5 // pred_check
        %p181 = pneg %p180
      $region30: #{tpu_custom_call.1} parent=5 // pred_check_branch
        %183 = sbr.rel (%p181) target = $region32
      $region31: #{tpu_custom_call.1} parent=5 // pred_region
        // Predicated region
        $region33: #{tpu_custom_call.1} parent=31 // pred_check
          %p184 = pneg %p37
        $region34: #{tpu_custom_call.1} parent=31 // pred_check_branch
          %186 = sbr.rel (%p184) target = $region36
        $region35: #{tpu_custom_call.1} parent=31 // pred_region
          %s187 = sand.u32 %s27, 1
          %s188 = scalar_lea.sflag [#allocation5], %s187
          %s189 = sand.u32 %s27, 1
          %s190 = smul.addr %s189, 16
          %s191 = scalar_lea.vmem [#allocation4], %s190
          %s193 = ssub.s32 256, 256
          %194 = vsyncadd %s188, %s193
          %s195 = smul.addr %s17, 2
          %s196 = smul.addr %s195, 128
          %s197 = scalar_lea.hbm %s0, %s196
          %s199 = sshll.u32 %s191, 4
          %s200 = int_to_ptr.vmem [resolvable:$true] %s199
          %202 = dma.hbm_to_vmem [thread:$0]  %s197, 256, %s200, %s188
        $region36: #{tpu_custom_call.1} parent=31 // pred_fallthru
          _
      $region32: #{tpu_custom_call.1} parent=5 // pred_fallthru
        _
      %p203 = scmp.le.s32.totalorder 1, %s17
      %p204 = scmp.lt.s32.totalorder %s17, 3
      %p205 = pnand %p203, %p204
      %p206 = pneg %p205
      // Predicated region
      $region37: #{tpu_custom_call.1} parent=5 // pred_check
        _
      $region38: #{tpu_custom_call.1} parent=5 // pred_check_branch
        %208 = sbr.rel (%p205) target = $region40
      $region39: #{tpu_custom_call.1} parent=5 // pred_region
        %s209 = ssub.s32 %s17, 1
        %s210 = sand.u32 %s30, 1
        %s211 = scalar_lea.sflag [#allocation5], %s210
        %s212 = sand.u32 %s30, 1
        %s213 = smul.addr %s212, 16
        %s214 = scalar_lea.vmem [#allocation4], %s213
        // Predicated region
        $region41: #{tpu_custom_call.1} parent=39 // pred_check
          %p215 = pneg %p43
        $region42: #{tpu_custom_call.1} parent=39 // pred_check_branch
          %217 = sbr.rel (%p215) target = $region44
        $region43: #{tpu_custom_call.1} parent=39 // pred_region
          %218 = dma.done %s211, 256
        $region44: #{tpu_custom_call.1} parent=39 // pred_fallthru
          _
        %s219 = sand.u32 %s30, 1
        %s220 = scalar_lea.sflag [#allocation5], %s219
        %s221 = sand.u32 %s30, 1
        %s222 = smul.addr %s221, 16
        %s223 = scalar_lea.vmem [#allocation4], %s222
        %p224 = pneg %p43
        %p225 = pneg %p40
        %p226 = pneg %p64
        %p227 = pneg %p61
        %p228 = pneg %p85
        %p229 = pneg %p82
        %p230 = pneg %p106
        %p231 = pneg %p103
        %p232 = pneg %p127
        %p233 = pneg %p124
        %p234 = pneg %p153
        %p235 = pneg %p150
        %s236 = sand.u32 %s140, 1
        %s237 = scalar_lea.sflag [#allocation6], %s236
        %s238 = sand.u32 %s140, 1
        %s239 = smul.addr %s238, 16
        %s240 = scalar_lea.vmem [#allocation7], %s239
        %v242 = vld [vmem:[%s214] sm:$0xff]
        %v243 = vld [vmem:[%s214 + $0x8] sm:$0xff]
        %v244 = vlaneseq
        %v245 = vand.u32 %v244, 127
        %v246 = vadd.s32 %v245, 128
        %vm247 = vcmp.lt.s32.totalorder %v245, 0
        %v248 = vsub.s32 0, %v245
        %v249 = vsel %vm247, %v248, %v245
        %v250 = vshrl.u32 %v249, 4
        %v251 = vand.u32 %v249, 15
        %v252 = vsub.s32 0, %v251
        %v253 = vsel %vm247, %v252, %v251
        %vm254 = vcmp.lt.s32.totalorder %v246, 0
        %v255 = vsub.s32 0, %v246
        %v256 = vsel %vm254, %v255, %v246
        %v257 = vshrl.u32 %v256, 4
        %v258 = vand.u32 %v256, 15
        %v259 = vsub.s32 0, %v258
        %v260 = vsel %vm254, %v259, %v258
        %vm261 = vcmp.ne.s32.totalorder %v253, 0
        %vm262 = vcmp.ne.s32.totalorder %v260, 0
        %vm263 = vcmp.lt.s32.totalorder %v253, 0
        %vm264 = vcmp.lt.s32.totalorder %v260, 0
        %vm265 = vmand %vm263, %vm261
        %vm266 = vmand %vm264, %vm262
        %v267 = vadd.s32 %v253, 16
        %v268 = vadd.s32 %v260, 16
        %v269 = vsel %vm265, %v267, %v253
        %v270 = vsel %vm266, %v268, %v260
        %vm271 = vcmp.ge.s32.totalorder %v269, 1
        %vm272 = vcmp.ge.s32.totalorder %v270, 1
        %vm273 = vcmp.le.s32.totalorder %v269, 14
        %vm274 = vcmp.le.s32.totalorder %v270, 14
        %275 = vst [vmem:[#allocation2] sm:$0xff] 0.0
        %276 = vst [vmem:[#allocation2 + $0x8] sm:$0xff] 0.0
        %277 = vst [vmem:[#allocation2 + $0x10] sm:$0xff] 0.0
        %278 = vst [vmem:[#allocation2 + $0x18] sm:$0xff] 0.0
        %279 = vst [vmem:[#allocation2 + $0x8] sm:$0xff] %v242
        %280 = vst [vmem:[#allocation2 + $0x10] sm:$0xff] %v243
        %v281 = vld [vmem:[#allocation2] sm:$0xff]
        %v282 = vld [vmem:[#allocation2 + $0x8] sm:$0xff]
        %v283 = vld [vmem:[#allocation2 + $0x10] sm:$0xff]
        %v284 = vsel %vm271, 1, 0
        %v285 = vsel %vm272, 1, 0
        %vm286 = vcmp.eq.s32.totalorder %v284, 1
        %vm287 = vcmp.eq.s32.totalorder %v285, 1
        %291 = vrot.lane.b32.xlu0 %v281, 17
        %v292 = vpop.permute.xlu0 %291
        %293 = vrot.lane.b32.xlu0 %v282, 17
        %v294 = vpop.permute.xlu0 %293
        %295 = vrot.lane.b32.xlu0 %v283, 17
        %v296 = vpop.permute.xlu0 %295
        %vm297 = vcmask 138240
        %v298 = vsel %vm297, %v292, %v294
        %v299 = vsel %vm297, %v294, %v296
        %v302 = vsel %vm286, %v298, 0.0
        %v303 = vsel %vm287, %v299, 0.0
        %v304 = vsel %vm273, 1, 0
        %v305 = vsel %vm274, 1, 0
        %vm306 = vcmp.eq.s32.totalorder %v304, 1
        %vm307 = vcmp.eq.s32.totalorder %v305, 1
        %308 = vrot.lane.b32.xlu0 %v281, 15
        %v309 = vpop.permute.xlu0 %308
        %310 = vrot.lane.b32.xlu0 %v282, 15
        %v311 = vpop.permute.xlu0 %310
        %312 = vrot.lane.b32.xlu0 %v283, 15
        %v313 = vpop.permute.xlu0 %312
        %vm314 = vcmask 121856
        %v315 = vsel %vm314, %v309, %v311
        %v316 = vsel %vm314, %v311, %v313
        %v319 = vsel %vm306, %v315, 0.0
        %v320 = vsel %vm307, %v316, 0.0
        %321 = vrot.lane.b32.xlu0 %v281, 1
        %v322 = vpop.permute.xlu0 %321
        %323 = vrot.lane.b32.xlu0 %v282, 1
        %v324 = vpop.permute.xlu0 %323
        %325 = vrot.lane.b32.xlu0 %v283, 1
        %v326 = vpop.permute.xlu0 %325
        %vm327 = vcmask 7168
        %v328 = vsel %vm327, %v322, %v324
        %v329 = vsel %vm327, %v324, %v326
        %v332 = vsel %vm286, %v328, 0.0
        %v333 = vsel %vm287, %v329, 0.0
        %v334 = vld [vmem:[#allocation2 + $0x8] sm:$0xff]
        %v335 = vld [vmem:[#allocation2 + $0x10] sm:$0xff]
        %v336 = vld [vmem:[#allocation2 + $0x18] sm:$0xff]
        %340 = vrot.lane.b32.xlu0 %v334, 127
        %v341 = vpop.permute.xlu0 %340
        %342 = vrot.lane.b32.xlu0 %v335, 127
        %v343 = vpop.permute.xlu0 %342
        %344 = vrot.lane.b32.xlu0 %v336, 127
        %v345 = vpop.permute.xlu0 %344
        %vm346 = vcmask 1039360
        %v347 = vsel %vm346, %v341, %v343
        %v348 = vsel %vm346, %v343, %v345
        %v351 = vsel %vm306, %v347, 0.0
        %v352 = vsel %vm307, %v348, 0.0
        %353 = vrot.lane.b32.xlu0 %v334, 113
        %v354 = vpop.permute.xlu0 %353
        %355 = vrot.lane.b32.xlu0 %v335, 113
        %v356 = vpop.permute.xlu0 %355
        %357 = vrot.lane.b32.xlu0 %v336, 113
        %v358 = vpop.permute.xlu0 %357
        %vm359 = vcmask 924672
        %v360 = vsel %vm359, %v354, %v356
        %v361 = vsel %vm359, %v356, %v358
        %v364 = vsel %vm286, %v360, 0.0
        %v365 = vsel %vm287, %v361, 0.0
        %366 = vrot.lane.b32.xlu0 %v334, 111
        %v367 = vpop.permute.xlu0 %366
        %368 = vrot.lane.b32.xlu0 %v335, 111
        %v369 = vpop.permute.xlu0 %368
        %370 = vrot.lane.b32.xlu0 %v336, 111
        %v371 = vpop.permute.xlu0 %370
        %vm372 = vcmask 908288
        %v373 = vsel %vm372, %v367, %v369
        %v374 = vsel %vm372, %v369, %v371
        %v377 = vsel %vm306, %v373, 0.0
        %v378 = vsel %vm307, %v374, 0.0
        %379 = vrot.lane.b32.xlu0 %v281, 16
        %v380 = vpop.permute.xlu0 %379
        %381 = vrot.lane.b32.xlu0 %v282, 16
        %v382 = vpop.permute.xlu0 %381
        %383 = vrot.lane.b32.xlu0 %v283, 16
        %v384 = vpop.permute.xlu0 %383
        %vm385 = vcmask 130048
        %v386 = vsel %vm385, %v380, %v382
        %v387 = vsel %vm385, %v382, %v384
        %390 = vrot.lane.b32.xlu0 %v334, 112
        %v391 = vpop.permute.xlu0 %390
        %392 = vrot.lane.b32.xlu0 %v335, 112
        %v393 = vpop.permute.xlu0 %392
        %394 = vrot.lane.b32.xlu0 %v336, 112
        %v395 = vpop.permute.xlu0 %394
        %vm396 = vcmask 916480
        %v397 = vsel %vm396, %v391, %v393
        %v398 = vsel %vm396, %v393, %v395
        %v401 = vpack.c.bf16 %v386, %v302
        %v402 = vpack.c.bf16 %v387, %v303
        %v403 = vpack.c.bf16 %v332, %v319
        %v404 = vpack.c.bf16 %v333, %v320
        %v405 = vpack.c.bf16 %v351, %v282
        %v406 = vpack.c.bf16 %v352, %v283
        %v407 = vpack.c.bf16 %v397, %v364
        %v408 = vpack.c.bf16 %v398, %v365
        %v409 = vpack.c.bf16 %v377, %v377
        %v410 = vpack.c.bf16 %v378, %v378
        %v411 = vld [vmem:[%s1] sm:$0xf]
        %v412 = vld [vmem:[%s2] sm:$0xff]
        %414 = vset.pattern.permute.xlu0 0
        %415 = vperm.xlu0 %414, %v412
        %v416 = vpop.permute.xlu0 %415
        %vm418 = vcmask 588800
        %v420 = vsel %vm418, %v411, 0
        %vm422 = vcmask 1043456
        %v424 = vsel %vm422, %v409, 0
        %v427 = vsel %vm422, %v410, 0
        %429 = vmatprep.subr.bf16.mxu0 0
        %430 = vmatpush1.bf16.msra.mxu0 0
        %431 = vmatprep.subr.bf16.mxu0 0
        %432 = vmatpush1.bf16.msra.mxu0 0
        %433 = vmatprep.subr.bf16.mxu0 0
        %434 = vmatpush1.bf16.msra.mxu0 0
        %435 = vmatprep.subr.bf16.mxu0 %v427
        %436 = vmatpush1.bf16.msra.mxu0 %v424
        %437 = vmatprep.subr.bf16.mxu0 %v408
        %438 = vmatpush1.bf16.msra.mxu0 %v407
        %439 = vmatprep.subr.bf16.mxu0 %v406
        %440 = vmatpush1.bf16.msra.mxu0 %v405
        %441 = vmatprep.subr.bf16.mxu0 %v404
        %442 = vmatpush1.bf16.msra.mxu0 %v403
        %443 = vmatprep.subr.bf16.mxu0 %v402
        %444 = vmatpush1.bf16.msra.mxu0 %v401
        %445 = vmatprep.subr.bf16.mxu0 0
        %446 = vmatpush2.bf16.msra.mxu0 0
        %447 = vmatprep.subr.bf16.mxu0 0
        %448 = vmatpush2.bf16.msra.mxu0 0
        %449 = vmatprep.subr.bf16.mxu0 0
        %450 = vmatpush2.bf16.msra.mxu0 0
        %451 = vmatprep.subr.bf16.mxu0 0
        %452 = vmatpush2.bf16.msra.mxu0 0
        %453 = vmatprep.subr.bf16.mxu0 0
        %454 = vmatpush2.bf16.msra.mxu0 0
        %455 = vmatprep.subr.bf16.mxu0 0
        %456 = vmatpush2.bf16.msra.mxu0 0
        %457 = vmatprep.subr.bf16.mxu0 0
        %458 = vmatpush2.bf16.msra.mxu0 0
        %459 = vmatprep.subr.bf16.mxu0 0
        %460 = vmatpush2.bf16.msra.mxu0 0
        %461 = vmatprep.mubr.bf16.mxu0 0
        %462 = vmatmul.mubr.bf16.gmra.mxu0 %v420
        %v463 = vpop.f32.mrf.mxu0
        %v464 = vadd.f32 %v416, %v463
        %v465 = vpop.f32.mrf.mxu0
        %v466 = vadd.f32 %v416, %v465
        %v467 = vpop.f32.mrf.mxu0
        %v468 = vpop.f32.mrf.mxu0
        %469 = vdwg.mxu0
        %v470 = vmax.f32 %v464, 0.0
        %v471 = vmax.f32 %v466, 0.0
        %472 = vst [vmem:[#allocation3] sm:$0xff] 0.0
        %473 = vst [vmem:[#allocation3 + $0x8] sm:$0xff] 0.0
        %474 = vst [vmem:[#allocation3 + $0x10] sm:$0xff] 0.0
        %475 = vst [vmem:[#allocation3 + $0x18] sm:$0xff] 0.0
        %476 = vst [vmem:[#allocation3 + $0x8] sm:$0xff] %v470
        %477 = vst [vmem:[#allocation3 + $0x10] sm:$0xff] %v471
        %v478 = vld [vmem:[#allocation3] sm:$0xff]
        %v479 = vld [vmem:[#allocation3 + $0x8] sm:$0xff]
        %v480 = vld [vmem:[#allocation3 + $0x10] sm:$0xff]
        %484 = vrot.lane.b32.xlu0 %v478, 17
        %v485 = vpop.permute.xlu0 %484
        %486 = vrot.lane.b32.xlu0 %v479, 17
        %v487 = vpop.permute.xlu0 %486
        %488 = vrot.lane.b32.xlu0 %v480, 17
        %v489 = vpop.permute.xlu0 %488
        %v490 = vsel %vm297, %v485, %v487
        %v491 = vsel %vm297, %v487, %v489
        %v494 = vsel %vm286, %v490, 0.0
        %v495 = vsel %vm287, %v491, 0.0
        %496 = vrot.lane.b32.xlu0 %v478, 15
        %v497 = vpop.permute.xlu0 %496
        %498 = vrot.lane.b32.xlu0 %v479, 15
        %v499 = vpop.permute.xlu0 %498
        %500 = vrot.lane.b32.xlu0 %v480, 15
        %v501 = vpop.permute.xlu0 %500
        %v502 = vsel %vm314, %v497, %v499
        %v503 = vsel %vm314, %v499, %v501
        %v506 = vsel %vm306, %v502, 0.0
        %v507 = vsel %vm307, %v503, 0.0
        %508 = vrot.lane.b32.xlu0 %v478, 1
        %v509 = vpop.permute.xlu0 %508
        %510 = vrot.lane.b32.xlu0 %v479, 1
        %v511 = vpop.permute.xlu0 %510
        %512 = vrot.lane.b32.xlu0 %v480, 1
        %v513 = vpop.permute.xlu0 %512
        %v514 = vsel %vm327, %v509, %v511
        %v515 = vsel %vm327, %v511, %v513
        %v518 = vsel %vm286, %v514, 0.0
        %v519 = vsel %vm287, %v515, 0.0
        %v520 = vld [vmem:[#allocation3 + $0x8] sm:$0xff]
        %v521 = vld [vmem:[#allocation3 + $0x10] sm:$0xff]
        %v522 = vld [vmem:[#allocation3 + $0x18] sm:$0xff]
        %526 = vrot.lane.b32.xlu0 %v520, 127
        %v527 = vpop.permute.xlu0 %526
        %528 = vrot.lane.b32.xlu0 %v521, 127
        %v529 = vpop.permute.xlu0 %528
        %530 = vrot.lane.b32.xlu0 %v522, 127
        %v531 = vpop.permute.xlu0 %530
        %v532 = vsel %vm346, %v527, %v529
        %v533 = vsel %vm346, %v529, %v531
        %v536 = vsel %vm306, %v532, 0.0
        %v537 = vsel %vm307, %v533, 0.0
        %538 = vrot.lane.b32.xlu0 %v520, 113
        %v539 = vpop.permute.xlu0 %538
        %540 = vrot.lane.b32.xlu0 %v521, 113
        %v541 = vpop.permute.xlu0 %540
        %542 = vrot.lane.b32.xlu0 %v522, 113
        %v543 = vpop.permute.xlu0 %542
        %v544 = vsel %vm359, %v539, %v541
        %v545 = vsel %vm359, %v541, %v543
        %v548 = vsel %vm286, %v544, 0.0
        %v549 = vsel %vm287, %v545, 0.0
        %550 = vrot.lane.b32.xlu0 %v520, 111
        %v551 = vpop.permute.xlu0 %550
        %552 = vrot.lane.b32.xlu0 %v521, 111
        %v553 = vpop.permute.xlu0 %552
        %554 = vrot.lane.b32.xlu0 %v522, 111
        %v555 = vpop.permute.xlu0 %554
        %v556 = vsel %vm372, %v551, %v553
        %v557 = vsel %vm372, %v553, %v555
        %v560 = vsel %vm306, %v556, 0.0
        %v561 = vsel %vm307, %v557, 0.0
        %562 = vrot.lane.b32.xlu0 %v478, 16
        %v563 = vpop.permute.xlu0 %562
        %564 = vrot.lane.b32.xlu0 %v479, 16
        %v565 = vpop.permute.xlu0 %564
        %566 = vrot.lane.b32.xlu0 %v480, 16
        %v567 = vpop.permute.xlu0 %566
        %v568 = vsel %vm385, %v563, %v565
        %v569 = vsel %vm385, %v565, %v567
        %572 = vrot.lane.b32.xlu0 %v520, 112
        %v573 = vpop.permute.xlu0 %572
        %574 = vrot.lane.b32.xlu0 %v521, 112
        %v575 = vpop.permute.xlu0 %574
        %576 = vrot.lane.b32.xlu0 %v522, 112
        %v577 = vpop.permute.xlu0 %576
        %v578 = vsel %vm396, %v573, %v575
        %v579 = vsel %vm396, %v575, %v577
        %v582 = vpack.c.bf16 %v568, %v494
        %v583 = vpack.c.bf16 %v569, %v495
        %v584 = vpack.c.bf16 %v518, %v506
        %v585 = vpack.c.bf16 %v519, %v507
        %v586 = vpack.c.bf16 %v536, %v479
        %v587 = vpack.c.bf16 %v537, %v480
        %v588 = vpack.c.bf16 %v578, %v548
        %v589 = vpack.c.bf16 %v579, %v549
        %v590 = vpack.c.bf16 %v560, %v560
        %v591 = vpack.c.bf16 %v561, %v561
        %v592 = vld [vmem:[%s3] sm:$0xf]
        %v593 = vld [vmem:[%s4] sm:$0xff]
        %595 = vset.pattern.permute.xlu0 0
        %596 = vperm.xlu0 %595, %v593
        %v597 = vpop.permute.xlu0 %596
        %v600 = vsel %vm418, %v592, 0
        %v603 = vsel %vm422, %v590, 0
        %v606 = vsel %vm422, %v591, 0
        %608 = vmatprep.subr.bf16.mxu0 0
        %609 = vmatpush1.bf16.msra.mxu0 0
        %610 = vmatprep.subr.bf16.mxu0 0
        %611 = vmatpush1.bf16.msra.mxu0 0
        %612 = vmatprep.subr.bf16.mxu0 0
        %613 = vmatpush1.bf16.msra.mxu0 0
        %614 = vmatprep.subr.bf16.mxu0 %v606
        %615 = vmatpush1.bf16.msra.mxu0 %v603
        %616 = vmatprep.subr.bf16.mxu0 %v589
        %617 = vmatpush1.bf16.msra.mxu0 %v588
        %618 = vmatprep.subr.bf16.mxu0 %v587
        %619 = vmatpush1.bf16.msra.mxu0 %v586
        %620 = vmatprep.subr.bf16.mxu0 %v585
        %621 = vmatpush1.bf16.msra.mxu0 %v584
        %622 = vmatprep.subr.bf16.mxu0 %v583
        %623 = vmatpush1.bf16.msra.mxu0 %v582
        %624 = vmatprep.subr.bf16.mxu0 0
        %625 = vmatpush2.bf16.msra.mxu0 0
        %626 = vmatprep.subr.bf16.mxu0 0
        %627 = vmatpush2.bf16.msra.mxu0 0
        %628 = vmatprep.subr.bf16.mxu0 0
        %629 = vmatpush2.bf16.msra.mxu0 0
        %630 = vmatprep.subr.bf16.mxu0 0
        %631 = vmatpush2.bf16.msra.mxu0 0
        %632 = vmatprep.subr.bf16.mxu0 0
        %633 = vmatpush2.bf16.msra.mxu0 0
        %634 = vmatprep.subr.bf16.mxu0 0
        %635 = vmatpush2.bf16.msra.mxu0 0
        %636 = vmatprep.subr.bf16.mxu0 0
        %637 = vmatpush2.bf16.msra.mxu0 0
        %638 = vmatprep.subr.bf16.mxu0 0
        %639 = vmatpush2.bf16.msra.mxu0 0
        %640 = vmatprep.mubr.bf16.mxu0 0
        %641 = vmatmul.mubr.bf16.gmra.mxu0 %v600
        %v642 = vpop.f32.mrf.mxu0
        %v643 = vadd.f32 %v597, %v642
        %v644 = vpop.f32.mrf.mxu0
        %v645 = vadd.f32 %v597, %v644
        %v646 = vpop.f32.mrf.mxu0
        %v647 = vpop.f32.mrf.mxu0
        %648 = vdwg.mxu0
        %v649 = vadd.f32 %v643, %v242
        %v650 = vadd.f32 %v645, %v243
        %651 = vst [vmem:[%s240] sm:$0xff] %v649
        %652 = vst [vmem:[%s240 + $0x8] sm:$0xff] %v650
        %s653 = sand.u32 %s140, 1
        %s654 = scalar_lea.sflag [#allocation6], %s653
        %s655 = sand.u32 %s140, 1
        %s656 = smul.addr %s655, 16
        %s657 = scalar_lea.vmem [#allocation7], %s656
        // Predicated region
        $region45: #{tpu_custom_call.1} parent=39 // pred_check
          %p658 = pneg %p150
        $region46: #{tpu_custom_call.1} parent=39 // pred_check_branch
          %660 = sbr.rel (%p658) target = $region48
        $region47: #{tpu_custom_call.1} parent=39 // pred_region
          %s662 = ssub.s32 256, 256
          %663 = vsyncadd %s654, %s662
          %s664 = smul.addr %s22, 2
          %s665 = smul.addr %s664, 128
          %s666 = scalar_lea.hbm %s5, %s665
          %s668 = sshll.u32 %s657, 4
          %s669 = int_to_ptr.vmem [resolvable:$true] %s668
          %671 = dma.vmem_to_hbm [thread:$0]  %s669, 256, %s666, %s654
        $region48: #{tpu_custom_call.1} parent=39 // pred_fallthru
          _
      $region40: #{tpu_custom_call.1} parent=5 // pred_fallthru
        _
      %p672 = scmp.le.s32.totalorder 2, %s17
      // Predicated region
      $region49: #{tpu_custom_call.1} parent=5 // pred_check
        %p673 = pneg %p672
      $region50: #{tpu_custom_call.1} parent=5 // pred_check_branch
        %675 = sbr.rel (%p673) target = $region52
      $region51: #{tpu_custom_call.1} parent=5 // pred_region
        %s676 = ssub.s32 %s17, 2
        // Predicated region
        $region53: #{tpu_custom_call.1} parent=51 // pred_check
          %p677 = pneg %p156
        $region54: #{tpu_custom_call.1} parent=51 // pred_check_branch
          %679 = sbr.rel (%p677) target = $region56
        $region55: #{tpu_custom_call.1} parent=51 // pred_region
          %s680 = sand.u32 %s141, 1
          %s681 = scalar_lea.sflag [#allocation6], %s680
          %s682 = sand.u32 %s141, 1
          %s683 = smul.addr %s682, 16
          %s684 = scalar_lea.vmem [#allocation7], %s683
          %685 = dma.done %s681, 256
        $region56: #{tpu_custom_call.1} parent=51 // pred_fallthru
          _
      $region52: #{tpu_custom_call.1} parent=5 // pred_fallthru
        _
    $region6: #{tpu_custom_call.1} parent=1 // loop_footer
      %s21 = sadd.s32 1, %s17
    $region7: #{tpu_custom_call.1} parent=1 // loop_footer_branch
      %16 = sbr.rel target = $region3
    $region8: #{tpu_custom_call.1} parent=1 // loop_exit
      _
    %686 = vsyncpa [#allocation5], 1
    %s687 = scalar_lea.sflag [#allocation5], 1
    %688 = vsyncpa %s687, 1
    %689 = vsyncpa [#allocation6], 1
    %s690 = scalar_lea.sflag [#allocation6], 1
    %691 = vsyncpa %s690, 1

</llo_original>
